<compile_context>
chip_gen: v5e
topology: v5e:2x2
jax: 0.10.0
libtpu: 0.0.40
codegen_flags: <defaults>
</compile_context>

<pallas_src>
import functools

import jax
import jax.numpy as jnp
from jax import lax
from jax.experimental import pallas as pl
from jax.experimental.pallas import tpu as pltpu


# ---------------------------------------------------------------------------
# Stage 1: fused Q/K/V projection.
# One (tp, C) @ (C, 3H) matmul per tile; the softmax scale is already folded
# into the query columns of the fused weight.
# ---------------------------------------------------------------------------
def _qkv_proj_kernel(x_ref, w_ref, q_ref, k_ref, v_ref, *, head_size):
    H = head_size
    qkv = jnp.dot(x_ref[...], w_ref[...], preferred_element_type=jnp.float32)
    q_ref[...] = qkv[:, :H].astype(q_ref.dtype)          # already scaled by 1/sqrt(C)
    k_ref[...] = qkv[:, H:2 * H].astype(k_ref.dtype)
    v_ref[...] = qkv[:, 2 * H:].astype(v_ref.dtype)


# ---------------------------------------------------------------------------
# Stage 2: flash attention over precomputed (q, k, v).
# grid = (B, T//tq, T//tk); online softmax state lives in VMEM scratch.
# ---------------------------------------------------------------------------
def _flash_kernel(q_ref, k_ref, v_ref, o_ref, m_scr, l_scr, acc_scr, *, tq, tk):
    qi = pl.program_id(1)
    ki = pl.program_id(2)
    nk = pl.num_programs(2)

    @pl.when(ki == 0)
    def _init():
        m_scr[...] = jnp.full(m_scr.shape, -jnp.inf, dtype=jnp.float32)
        l_scr[...] = jnp.zeros(l_scr.shape, dtype=jnp.float32)
        acc_scr[...] = jnp.zeros(acc_scr.shape, dtype=jnp.float32)

    q_row0 = qi * tq                 # first query row of this tile
    q_row_last = q_row0 + tq - 1
    k_col0 = ki * tk                 # first key column of this tile
    k_col_last = k_col0 + tk - 1

    def scores():
        # q @ k^T as a contraction over the head dim (no explicit transpose).
        return lax.dot_general(
            q_ref[...], k_ref[...],
            dimension_numbers=(((1,), (1,)), ((), ())),
            preferred_element_type=jnp.float32)          # (tq, tk) f32

    def online_update(s):
        m_prev = m_scr[...]
        m_new = jnp.maximum(m_prev, jnp.max(s, axis=-1, keepdims=True))
        alpha = jnp.exp(m_prev - m_new)
        p = jnp.exp(s - m_new)
        l_scr[...] = alpha * l_scr[...] + jnp.sum(p, axis=-1, keepdims=True)
        acc_scr[...] = alpha * acc_scr[...] + jnp.dot(
            p.astype(v_ref.dtype), v_ref[...], preferred_element_type=jnp.float32)
        m_scr[...] = m_new

    # Tile fully below/on the causal diagonal: no mask needed.
    @pl.when(k_col_last <= q_row0)
    def _below_diag():
        online_update(scores())

    # Tile crossing the diagonal: apply the causal mask (cheap (tq,1) vs (1,tk) iotas).
    @pl.when(jnp.logical_and(k_col0 <= q_row_last, k_col_last > q_row0))
    def _crossing_diag():
        row = q_row0 + lax.broadcasted_iota(jnp.int32, (tq, 1), 0)
        col = k_col0 + lax.broadcasted_iota(jnp.int32, (1, tk), 1)
        # -1e30 (not -inf): safe since every row has >=1 valid column in the ki==0 tile.
        s = jnp.where(col <= row, scores(), jnp.float32(-1e30))
        online_update(s)

    # Tiles fully above the diagonal contribute nothing; their kv block index is clamped
    # in the index_map, so those steps issue neither compute nor a fresh DMA.

    @pl.when(ki == nk - 1)
    def _finalize():
        l = l_scr[...]
        inv_l = pl.reciprocal(l, approx=True)     # EUP slot, nearly free
        inv_l = inv_l * (2.0 - l * inv_l)         # one Newton step -> f32 accuracy
        o_ref[...] = (acc_scr[...] * inv_l).astype(o_ref.dtype)


def head_forward(x, w_key, w_query, w_value, *, tq=None, tk=None, matmul_dtype=None):
    """x: (B, T, C); w_*: (C, H) (pre-transposed nn.Linear weights)."""
    B, T, C = x.shape
    H = w_key.shape[1]
    out_dtype = x.dtype
    if matmul_dtype is None:
        matmul_dtype = x.dtype            # bf16 inputs -> native bf16 MXU path
    scale = float(C) ** (-0.5)

    if tq is None:
        tq = min(T, 256)
    if tk is None:
        tk = min(T, 256)
    assert T % tq == 0 and T % tk == 0, "T must be divisible by the tile sizes"
    assert tq % 8 == 0 or tq == T, "tq must be a multiple of 8 (or equal T)"
    assert tk % 8 == 0 or tk == T, "tk must be a multiple of 8 (or equal T)"

    # Fold the 1/sqrt(C) scale into Wq and fuse [Wq | Wk | Wv] into one (C, 3H) weight.
    w_qkv = jnp.concatenate([w_query * scale, w_key, w_value], axis=1).astype(matmul_dtype)
    x_c = x.astype(matmul_dtype)

    # ---- Stage 1: fused Q/K/V projection (once per token, not once per kv tile) ----
    qkv_struct = jax.ShapeDtypeStruct((B, T, H), matmul_dtype)
    q, k, v = pl.pallas_call(
        functools.partial(_qkv_proj_kernel, head_size=H),
        out_shape=(qkv_struct, qkv_struct, qkv_struct),
        grid_spec=pltpu.PrefetchScalarGridSpec(
            num_scalar_prefetch=0,
            grid=(B, T // tq),
            in_specs=[
                pl.BlockSpec((None, tq, C), lambda b, t: (b, t, 0)),
                pl.BlockSpec((C, 3 * H), lambda b, t: (0, 0)),
            ],
            out_specs=[
                pl.BlockSpec((None, tq, H), lambda b, t: (b, t, 0)),
                pl.BlockSpec((None, tq, H), lambda b, t: (b, t, 0)),
                pl.BlockSpec((None, tq, H), lambda b, t: (b, t, 0)),
            ],
        ),
        compiler_params=pltpu.CompilerParams(
            dimension_semantics=("parallel", "parallel")),
    )(x_c, w_qkv)

    # ---- Stage 2: flash attention ----
    # Clamp the kv block index to the last causally-useful block so above-diagonal
    # steps re-use the previous block (no fresh DMA).
    kv_index = lambda b, qi, ki: (b, jnp.minimum(ki, (qi * tq + tq - 1) // tk), 0)

    return pl.pallas_call(
        functools.partial(_flash_kernel, tq=tq, tk=tk),
        out_shape=jax.ShapeDtypeStruct((B, T, H), out_dtype),
        grid_spec=pltpu.PrefetchScalarGridSpec(
            num_scalar_prefetch=0,
            grid=(B, T // tq, T // tk),
            in_specs=[
                pl.BlockSpec((None, tq, H), lambda b, qi, ki: (b, qi, 0)),   # q tile
                pl.BlockSpec((None, tk, H), kv_index),                       # k tile
                pl.BlockSpec((None, tk, H), kv_index),                       # v tile
            ],
            out_specs=pl.BlockSpec((None, tq, H), lambda b, qi, ki: (b, qi, 0)),
            scratch_shapes=[
                pltpu.VMEM((tq, 1), jnp.float32),   # running max m
                pltpu.VMEM((tq, 1), jnp.float32),   # running denom l
                pltpu.VMEM((tq, H), jnp.float32),   # output accumulator
            ],
        ),
        compiler_params=pltpu.CompilerParams(
            dimension_semantics=("parallel", "parallel", "arbitrary")),
    )(q, k, v)


def head_reference(x, w_key, w_query, w_value):
    """Pure-JAX reference mirroring the PyTorch forward."""
    B, T, C = x.shape
    k = x @ w_key
    q = x @ w_query
    v = x @ w_value
    wei = (q @ jnp.swapaxes(k, -2, -1)) * (C ** -0.5)
    tril = jnp.tril(jnp.ones((T, T), dtype=bool))
    wei = jnp.where(tril, wei, -jnp.inf)
    wei = jax.nn.softmax(wei, axis=-1)
    return wei @ v


def _run_case(key, B, T, C, H, *, tq=None, tk=None, dtype=jnp.float32,
              atol=2e-4, rtol=2e-4):
    kx, kk, kq, kvw = jax.random.split(key, 4)
    x = jax.random.normal(kx, (B, T, C), dtype=jnp.float32).astype(dtype)
    # nn.Linear(C, H, bias=False).weight has shape (H, C); store the transpose (C, H).
    w_key = (jax.random.normal(kk, (C, H), dtype=jnp.float32) * 0.1).astype(dtype)
    w_query = (jax.random.normal(kq, (C, H), dtype=jnp.float32) * 0.1).astype(dtype)
    w_value = (jax.random.normal(kvw, (C, H), dtype=jnp.float32) * 0.1).astype(dtype)

    out = jax.block_until_ready(head_forward(x, w_key, w_query, w_value, tq=tq, tk=tk))
    ref = head_reference(x.astype(jnp.float32), w_key.astype(jnp.float32),
                         w_query.astype(jnp.float32), w_value.astype(jnp.float32))
    assert out.shape == (B, T, H), out.shape
    err = jnp.max(jnp.abs(out.astype(jnp.float32) - ref))
    assert jnp.allclose(out.astype(jnp.float32), ref, atol=atol, rtol=rtol), \
        f"mismatch vs reference (max abs err {err})"


if __name__ == "__main__":
    # Module hyperparameters from the spec: batch=2, timesteps=block_size=8,
    # embedding_dimention=32, head_size=16.
    key = jax.random.PRNGKey(0)
    k1, k2, k3 = jax.random.split(key, 3)

    # Primary small case (single tile, f32).
    _run_case(k1, B=2, T=8, C=32, H=16)
    # Longer sequence with small explicit tiles: exercises the flash tiling, the clamped
    # kv index map (causal tile skip), the masked vs unmasked branches and the online
    # softmax accumulation across kv steps.
    _run_case(k2, B=2, T=256, C=64, H=16, tq=64, tk=64)
    # bf16 operands -> native MXU fast path on v5e/v6e/v7x; softmax stats stay f32 inside
    # the kernel, tolerance is the standard flash-attention bf16 tradeoff.
    _run_case(k3, B=2, T=256, C=64, H=16, tq=128, tk=128, dtype=jnp.bfloat16,
              atol=5e-2, rtol=5e-2)

    print("KERNEL_OK")
</pallas_src>

<mosaic_0001>
module attributes {stable_mosaic.version = 11 : i64} {
  func.func @_qkv_proj_kernel(%arg0: i32, %arg1: i32, %arg2: memref<1x8x32xf32, #tpu.memory_space<vmem>>, %arg3: memref<32x48xf32, #tpu.memory_space<vmem>>, %arg4: memref<1x8x16xf32, #tpu.memory_space<vmem>>, %arg5: memref<1x8x16xf32, #tpu.memory_space<vmem>>, %arg6: memref<1x8x16xf32, #tpu.memory_space<vmem>>) attributes {dimension_semantics = [#tpu.dimension_semantics<parallel>, #tpu.dimension_semantics<parallel>], iteration_bounds = array<i64: 2, 1>, scalar_prefetch = 0 : i64, scratch_operands = 0 : i64, tpu.core_type = #tpu.core_type<tc>, window_params = [{transform_indices = @transform_0, window_bounds = array<i64: 1, 8, 32>}, {pipeline_mode = #tpu.pipeline_mode<synchronous>, transform_indices = @transform_1, window_bounds = array<i64: 32, 48>}, {transform_indices = @transform_2, window_bounds = array<i64: 1, 8, 16>}, {transform_indices = @transform_3, window_bounds = array<i64: 1, 8, 16>}, {transform_indices = @transform_4, window_bounds = array<i64: 1, 8, 16>}]} {
    %c0 = arith.constant 0 : index
    %c0_0 = arith.constant 0 : index
    %c0_1 = arith.constant 0 : index
    %0 = vector.load %arg2[%c0, %c0_0, %c0_1] : memref<1x8x32xf32, #tpu.memory_space<vmem>>, vector<1x8x32xf32>
    %1 = vector.shape_cast %0 : vector<1x8x32xf32> to vector<8x32xf32>
    %c0_2 = arith.constant 0 : index
    %c0_3 = arith.constant 0 : index
    %2 = vector.load %arg3[%c0_2, %c0_3] : memref<32x48xf32, #tpu.memory_space<vmem>>, vector<32x48xf32>
    %cst = arith.constant dense<0.000000e+00> : vector<8x48xf32>
    %3 = tpu.matmul %1, %2, %cst {dimension_numbers = #tpu.dot_dimension_numbers<[1], [0], [0], [1], [0, 0, 1, 1], [], []>} : vector<8x32xf32>, vector<32x48xf32>, vector<8x48xf32> -> vector<8x48xf32>
    %4 = vector.extract_strided_slice %3 {offsets = [0, 0], sizes = [8, 16], strides = [1, 1]} : vector<8x48xf32> to vector<8x16xf32>
    %c0_4 = arith.constant 0 : index
    %c0_5 = arith.constant 0 : index
    %c0_6 = arith.constant 0 : index
    %5 = vector.load %arg4[%c0_4, %c0_5, %c0_6] : memref<1x8x16xf32, #tpu.memory_space<vmem>>, vector<1x8x16xf32>
    %6 = vector.shape_cast %5 : vector<1x8x16xf32> to vector<8x16xf32>
    %7 = vector.shape_cast %4 : vector<8x16xf32> to vector<1x8x16xf32>
    tpu.vector_store %arg4[%c0_4, %c0_5, %c0_6], %7 {strides = array<i32>} : memref<1x8x16xf32, #tpu.memory_space<vmem>>, vector<1x8x16xf32>,
    %8 = vector.extract_strided_slice %3 {offsets = [0, 16], sizes = [8, 16], strides = [1, 1]} : vector<8x48xf32> to vector<8x16xf32>
    %c0_7 = arith.constant 0 : index
    %c0_8 = arith.constant 0 : index
    %c0_9 = arith.constant 0 : index
    %9 = vector.load %arg5[%c0_7, %c0_8, %c0_9] : memref<1x8x16xf32, #tpu.memory_space<vmem>>, vector<1x8x16xf32>
    %10 = vector.shape_cast %9 : vector<1x8x16xf32> to vector<8x16xf32>
    %11 = vector.shape_cast %8 : vector<8x16xf32> to vector<1x8x16xf32>
    tpu.vector_store %arg5[%c0_7, %c0_8, %c0_9], %11 {strides = array<i32>} : memref<1x8x16xf32, #tpu.memory_space<vmem>>, vector<1x8x16xf32>,
    %12 = vector.extract_strided_slice %3 {offsets = [0, 32], sizes = [8, 16], strides = [1, 1]} : vector<8x48xf32> to vector<8x16xf32>
    %c0_10 = arith.constant 0 : index
    %c0_11 = arith.constant 0 : index
    %c0_12 = arith.constant 0 : index
    %13 = vector.load %arg6[%c0_10, %c0_11, %c0_12] : memref<1x8x16xf32, #tpu.memory_space<vmem>>, vector<1x8x16xf32>
    %14 = vector.shape_cast %13 : vector<1x8x16xf32> to vector<8x16xf32>
    %15 = vector.shape_cast %12 : vector<8x16xf32> to vector<1x8x16xf32>
    tpu.vector_store %arg6[%c0_10, %c0_11, %c0_12], %15 {strides = array<i32>} : memref<1x8x16xf32, #tpu.memory_space<vmem>>, vector<1x8x16xf32>,
    return
  }
  func.func @transform_0(%arg0: i32, %arg1: i32) -> (i32, i32, i32) {
    %c0_i32 = arith.constant 0 : i32
    %c0_i32_0 = arith.constant 0 : i32
    return %arg0, %arg1, %c0_i32 : i32, i32, i32
  }
  func.func @transform_1(%arg0: i32, %arg1: i32) -> (i32, i32) {
    %c0_i32 = arith.constant 0 : i32
    %c0_i32_0 = arith.constant 0 : i32
    %c0_i32_1 = arith.constant 0 : i32
    return %c0_i32, %c0_i32_0 : i32, i32
  }
  func.func @transform_2(%arg0: i32, %arg1: i32) -> (i32, i32, i32) {
    %c0_i32 = arith.constant 0 : i32
    %c0_i32_0 = arith.constant 0 : i32
    return %arg0, %arg1, %c0_i32 : i32, i32, i32
  }
  func.func @transform_3(%arg0: i32, %arg1: i32) -> (i32, i32, i32) {
    %c0_i32 = arith.constant 0 : i32
    %c0_i32_0 = arith.constant 0 : i32
    return %arg0, %arg1, %c0_i32 : i32, i32, i32
  }
  func.func @transform_4(%arg0: i32, %arg1: i32) -> (i32, i32, i32) {
    %c0_i32 = arith.constant 0 : i32
    %c0_i32_0 = arith.constant 0 : i32
    return %arg0, %arg1, %c0_i32 : i32, i32, i32
  }
}

</mosaic_0001>

<llo_original>
// kernel: tpu_custom_call.1
$region0: #{tpu_custom_call.1}
  #allocation0 [shape = 'u32[]', space=smem, size = 0x4, offset = 0x4, fixed_abs, tag = 'smem constant byte address 0x4 - core index']
  #allocation1 [shape = 'u32[72,128]{1,0:T(1,128)}', space=vmem, size = 0x9000, scoped, tag = 'internal scratch']
  %s0 = inlined_call_operand.hbm [shape: f32[2,8,32], index: 0, kind: input, shape index: {}]
  %s1 = inlined_call_operand.hbm [shape: f32[32,48], index: 1, kind: input, shape index: {}]
  %s2 = inlined_call_operand.hbm [shape: f32[2,8,16], index: 2, kind: output, shape index: {0}]
  %s3 = inlined_call_operand.hbm [shape: f32[2,8,16], index: 3, kind: output, shape index: {1}]
  %s4 = inlined_call_operand.hbm [shape: f32[2,8,16], index: 4, kind: output, shape index: {2}]
  %5 = xla_tuple %s2, %s3, %s4
  %s6 = sld [smem:[#allocation0]]
  $region65: #{tpu_custom_call.1} parent=0
    _
  %s8 = ssub.s32 1, %s6
  %s9 = scalar_select 0, %s8, %s6
  $region1: #{tpu_custom_call.1} parent=0
    #allocation2 [shape = 'u8[8192]{0}', space=vmem, size = 0x2000, scoped, tag = 'input window, operand 0']
    #allocation3 [shape = 's32[2]{0}', space=sflag, size = 0x8, scoped, tag = 'scoped memory for tpu_custom_call.1']
    #allocation4 [shape = 's32[2]{0}', space=sflag, size = 0x8, scoped, tag = 'scoped memory for tpu_custom_call.1']
    #allocation5 [shape = 'u8[16384]{0}', space=vmem, size = 0x4000, scoped, tag = 'input window, operand 1, single buffered']
    #allocation6 [shape = 's32[1]{0}', space=sflag, size = 0x4, scoped, tag = 'scoped memory for tpu_custom_call.1']
    #allocation7 [shape = 'u8[8192]{0}', space=vmem, size = 0x2000, scoped, tag = 'output window, operand 0']
    #allocation8 [shape = 'u8[8192]{0}', space=vmem, size = 0x2000, scoped, tag = 'output window, operand 1']
    #allocation9 [shape = 's32[2]{0}', space=sflag, size = 0x8, scoped, tag = 'scoped memory for tpu_custom_call.1']
    #allocation10 [shape = 'u8[8192]{0}', space=vmem, size = 0x2000, scoped, tag = 'output window, operand 2']
    %10 = vsyncpa [#allocation3], 0
    %s11 = scalar_lea.sflag [#allocation3], 1
    %12 = vsyncpa %s11, 0
    %13 = vsyncpa [#allocation6], 0
    %14 = vsyncpa [#allocation4], 0
    %s15 = scalar_lea.sflag [#allocation4], 1
    %16 = vsyncpa %s15, 0
    %17 = vsyncpa [#allocation9], 0
    %s18 = scalar_lea.sflag [#allocation9], 1
    %19 = vsyncpa %s18, 0
    loop: start=0, step=1, limit=4
    $region2: #{tpu_custom_call.1} parent=1 // loop_pre_header
      _
    $region3: #{tpu_custom_call.1} parent=1 // loop_header
      %s21 = sphi 0, %s25
      %p22 = scmp.ge.s32.totalorder %s21, 4
      %s28 = sphi 0, %s40
      %s29 = sphi 0, %s36
      %s30 = sphi 0, %s28
      %s31 = sphi 0, %s29
      %s32 = sphi 0, %s30
      %s33 = sphi 0, %s31
      %s45 = sphi 0, %s47
      %s48 = sphi 0, %s45
      %s49 = sphi 0, %s48
      %s65 = sphi 0, %s49
      %s69 = sphi 0, %s69
      %s71 = sphi 0, %s69
      %s72 = sphi 0, %s71
      %s86 = sphi 0, %s72
      %s94 = sphi 0, %s96
      %s97 = sphi 0, %s94
      %s98 = sphi 0, %s97
      %s114 = sphi 0, %s98
      %s122 = sphi 0, %s124
      %s125 = sphi 0, %s122
      %s126 = sphi 0, %s125
      %s142 = sphi 0, %s126
      %s150 = sphi 0, %s152
      %s153 = sphi 0, %s150
      %s154 = sphi 0, %s153
      %s170 = sphi 0, %s154
    $region4: #{tpu_custom_call.1} parent=1 // loop_header_branch
      %24 = sbr.rel (%p22) target = $region8
    $region5: #{tpu_custom_call.1} parent=1 // loop_body
      %s26 = ssub.s32 %s21, 1
      %s27 = ssub.s32 %s21, 2
      %s34 = sadd.s32 1, %s29
      %p35 = scmp.ge.s32.totalorder %s34, 1
      %s36 = scalar_select %p35, 0, %s34
      %s37 = sadd.s32 1, %s28
      %s38 = scalar_select %p35, %s37, %s28
      %p39 = scmp.ge.s32.totalorder %s38, 2
      %s40 = scalar_select %p39, 0, %s38
      %s41 = ssub.s32 %s28, %s40
      %s42 = ssub.s32 %s29, %s36
      %s43 = sor.u32 %s41, %s42
      %p44 = scmp.eq.s32.totalorder %s43, 0
      %s46 = sadd.s32 %s45, 1
      %s47 = scalar_select %p44, %s45, %s46
      %p50 = pneg %p44
      %p51 = scmp.eq.s32.totalorder %s21, 1
      %p52 = por %p50, %p51
      %p53 = scmp.ne.s32.totalorder %s45, %s48
      %p54 = scmp.eq.s32.totalorder %s21, 0
      %p55 = por %p53, %p54
      %p56 = scmp.ne.s32.totalorder %s45, %s48
      %p57 = scmp.eq.s32.totalorder %s26, 1
      %p58 = por %p56, %p57
      %p59 = scmp.ne.s32.totalorder %s48, %s49
      %p60 = scmp.eq.s32.totalorder %s26, 0
      %p61 = por %p59, %p60
      %p62 = scmp.ne.s32.totalorder %s48, %s49
      %p63 = scmp.eq.s32.totalorder %s27, 1
      %p64 = por %p62, %p63
      %p66 = scmp.ne.s32.totalorder %s49, %s65
      %p67 = scmp.eq.s32.totalorder %s27, 0
      %p68 = por %p66, %p67
      %s70 = sadd.s32 %s69, 1
      %p73 = scmp.eq.s32.totalorder %s21, 1
      %p74 = scmp.ne.s32.totalorder %s69, %s71
      %p75 = scmp.eq.s32.totalorder %s21, 0
      %p76 = por %p74, %p75
      %p77 = scmp.ne.s32.totalorder %s69, %s71
      %p78 = scmp.eq.s32.totalorder %s26, 1
      %p79 = por %p77, %p78
      %p80 = scmp.ne.s32.totalorder %s71, %s72
      %p81 = scmp.eq.s32.totalorder %s26, 0
      %p82 = por %p80, %p81
      %p83 = scmp.ne.s32.totalorder %s71, %s72
      %p84 = scmp.eq.s32.totalorder %s27, 1
      %p85 = por %p83, %p84
      %p87 = scmp.ne.s32.totalorder %s72, %s86
      %p88 = scmp.eq.s32.totalorder %s27, 0
      %p89 = por %p87, %p88
      %s90 = ssub.s32 %s28, %s40
      %s91 = ssub.s32 %s29, %s36
      %s92 = sor.u32 %s90, %s91
      %p93 = scmp.eq.s32.totalorder %s92, 0
      %s95 = sadd.s32 %s94, 1
      %s96 = scalar_select %p93, %s94, %s95
      %p99 = pneg %p93
      %p100 = scmp.eq.s32.totalorder %s21, 1
      %p101 = por %p99, %p100
      %p102 = scmp.ne.s32.totalorder %s94, %s97
      %p103 = scmp.eq.s32.totalorder %s21, 0
      %p104 = por %p102, %p103
      %p105 = scmp.ne.s32.totalorder %s94, %s97
      %p106 = scmp.eq.s32.totalorder %s26, 1
      %p107 = por %p105, %p106
      %p108 = scmp.ne.s32.totalorder %s97, %s98
      %p109 = scmp.eq.s32.totalorder %s26, 0
      %p110 = por %p108, %p109
      %p111 = scmp.ne.s32.totalorder %s97, %s98
      %p112 = scmp.eq.s32.totalorder %s27, 1
      %p113 = por %p111, %p112
      %p115 = scmp.ne.s32.totalorder %s98, %s114
      %p116 = scmp.eq.s32.totalorder %s27, 0
      %p117 = por %p115, %p116
      %s118 = ssub.s32 %s28, %s40
      %s119 = ssub.s32 %s29, %s36
      %s120 = sor.u32 %s118, %s119
      %p121 = scmp.eq.s32.totalorder %s120, 0
      %s123 = sadd.s32 %s122, 1
      %s124 = scalar_select %p121, %s122, %s123
      %p127 = pneg %p121
      %p128 = scmp.eq.s32.totalorder %s21, 1
      %p129 = por %p127, %p128
      %p130 = scmp.ne.s32.totalorder %s122, %s125
      %p131 = scmp.eq.s32.totalorder %s21, 0
      %p132 = por %p130, %p131
      %p133 = scmp.ne.s32.totalorder %s122, %s125
      %p134 = scmp.eq.s32.totalorder %s26, 1
      %p135 = por %p133, %p134
      %p136 = scmp.ne.s32.totalorder %s125, %s126
      %p137 = scmp.eq.s32.totalorder %s26, 0
      %p138 = por %p136, %p137
      %p139 = scmp.ne.s32.totalorder %s125, %s126
      %p140 = scmp.eq.s32.totalorder %s27, 1
      %p141 = por %p139, %p140
      %p143 = scmp.ne.s32.totalorder %s126, %s142
      %p144 = scmp.eq.s32.totalorder %s27, 0
      %p145 = por %p143, %p144
      %s146 = ssub.s32 %s28, %s40
      %s147 = ssub.s32 %s29, %s36
      %s148 = sor.u32 %s146, %s147
      %p149 = scmp.eq.s32.totalorder %s148, 0
      %s151 = sadd.s32 %s150, 1
      %s152 = scalar_select %p149, %s150, %s151
      %p155 = pneg %p149
      %p156 = scmp.eq.s32.totalorder %s21, 1
      %p157 = por %p155, %p156
      %p158 = scmp.ne.s32.totalorder %s150, %s153
      %p159 = scmp.eq.s32.totalorder %s21, 0
      %p160 = por %p158, %p159
      %p161 = scmp.ne.s32.totalorder %s150, %s153
      %p162 = scmp.eq.s32.totalorder %s26, 1
      %p163 = por %p161, %p162
      %p164 = scmp.ne.s32.totalorder %s153, %s154
      %p165 = scmp.eq.s32.totalorder %s26, 0
      %p166 = por %p164, %p165
      %p167 = scmp.ne.s32.totalorder %s153, %s154
      %p168 = scmp.eq.s32.totalorder %s27, 1
      %p169 = por %p167, %p168
      %p171 = scmp.ne.s32.totalorder %s154, %s170
      %p172 = scmp.eq.s32.totalorder %s27, 0
      %p173 = por %p171, %p172
      %p174 = scmp.le.s32.totalorder 1, %s21
      %p175 = scmp.lt.s32.totalorder %s21, 3
      %p176 = pnand %p174, %p175
      %p177 = pneg %p176
      // Predicated region
      $region9: #{tpu_custom_call.1} parent=5 // pred_check
        _
      $region10: #{tpu_custom_call.1} parent=5 // pred_check_branch
        %179 = sbr.rel (%p176) target = $region12
      $region11: #{tpu_custom_call.1} parent=5 // pred_region
        %s180 = ssub.s32 %s21, 1
        // Predicated region
        $region13: #{tpu_custom_call.1} parent=11 // pred_check
          %p181 = pneg %p82
        $region14: #{tpu_custom_call.1} parent=11 // pred_check_branch
          %183 = sbr.rel (%p181) target = $region16
        $region15: #{tpu_custom_call.1} parent=11 // pred_region
          %185 = vsyncadd [#allocation6], 0
          %s186 = sshll.u32 %s1, 4
          %s187 = int_to_ptr.hbm [resolvable:$true] %s186
          %s188 = sshll.u32 [#allocation5], 4
          %s189 = int_to_ptr.vmem [resolvable:$true] %s188
          %194 = dma.hbm_to_vmem [thread:$0]  %s187, 512, %s189, [#allocation6], 128, 128, 8
        $region16: #{tpu_custom_call.1} parent=11 // pred_fallthru
          _
      $region12: #{tpu_custom_call.1} parent=5 // pred_fallthru
        _
      %p195 = scmp.lt.s32.totalorder %s21, 2
      // Predicated region
      $region17: #{tpu_custom_call.1} parent=5 // pred_check
        %p196 = pneg %p195
      $region18: #{tpu_custom_call.1} parent=5 // pred_check_branch
        %198 = sbr.rel (%p196) target = $region20
      $region19: #{tpu_custom_call.1} parent=5 // pred_region
        // Predicated region
        $region21: #{tpu_custom_call.1} parent=19 // pred_check
          %p199 = pneg %p55
        $region22: #{tpu_custom_call.1} parent=19 // pred_check_branch
          %201 = sbr.rel (%p199) target = $region24
        $region23: #{tpu_custom_call.1} parent=19 // pred_region
          %s202 = sand.u32 %s45, 1
          %s203 = scalar_lea.sflag [#allocation3], %s202
          %s204 = sand.u32 %s45, 1
          %s205 = smul.addr %s204, 8
          %s206 = scalar_lea.vmem [#allocation2], %s205
          %208 = vsyncadd %s203, 0
          %s209 = sadd.s32 %s29, %s28
          %s210 = smul.addr %s209, 8
          %s211 = scalar_lea.hbm %s0, %s210
          %s213 = sshll.u32 %s211, 4
          %s214 = int_to_ptr.hbm [resolvable:$true] %s213
          %s215 = sshll.u32 %s206, 4
          %s216 = int_to_ptr.vmem [resolvable:$true] %s215
          %218 = dma.hbm_to_vmem [thread:$0]  %s214, 128, %s216, %s203
        $region24: #{tpu_custom_call.1} parent=19 // pred_fallthru
          _
      $region20: #{tpu_custom_call.1} parent=5 // pred_fallthru
        _
      %p219 = scmp.le.s32.totalorder 1, %s21
      %p220 = scmp.lt.s32.totalorder %s21, 3
      %p221 = pnand %p219, %p220
      %p222 = pneg %p221
      // Predicated region
      $region25: #{tpu_custom_call.1} parent=5 // pred_check
        _
      $region26: #{tpu_custom_call.1} parent=5 // pred_check_branch
        %224 = sbr.rel (%p221) target = $region28
      $region27: #{tpu_custom_call.1} parent=5 // pred_region
        %s225 = ssub.s32 %s21, 1
        %s226 = sand.u32 %s48, 1
        %s227 = scalar_lea.sflag [#allocation3], %s226
        %s228 = sand.u32 %s48, 1
        %s229 = smul.addr %s228, 8
        %s230 = scalar_lea.vmem [#allocation2], %s229
        // Predicated region
        $region29: #{tpu_custom_call.1} parent=27 // pred_check
          %p231 = pneg %p61
        $region30: #{tpu_custom_call.1} parent=27 // pred_check_branch
          %233 = sbr.rel (%p231) target = $region32
        $region31: #{tpu_custom_call.1} parent=27 // pred_region
          %235 = dma.done %s227, 128
        $region32: #{tpu_custom_call.1} parent=27 // pred_fallthru
          _
        // Predicated region
        $region33: #{tpu_custom_call.1} parent=27 // pred_check
          %p236 = pneg %p82
        $region34: #{tpu_custom_call.1} parent=27 // pred_check_branch
          %238 = sbr.rel (%p236) target = $region36
        $region35: #{tpu_custom_call.1} parent=27 // pred_region
          %240 = dma.done [#allocation6], 512
        $region36: #{tpu_custom_call.1} parent=27 // pred_fallthru
          _
        %s241 = sand.u32 %s48, 1
        %s242 = scalar_lea.sflag [#allocation3], %s241
        %s243 = sand.u32 %s48, 1
        %s244 = smul.addr %s243, 8
        %s245 = scalar_lea.vmem [#allocation2], %s244
        %p246 = pneg %p61
        %p247 = pneg %p58
        %p248 = pneg %p82
        %p249 = pneg %p79
        %p250 = pneg %p110
        %p251 = pneg %p107
        %s252 = sand.u32 %s97, 1
        %s253 = scalar_lea.sflag [#allocation4], %s252
        %s254 = sand.u32 %s97, 1
        %s255 = smul.addr %s254, 8
        %s256 = scalar_lea.vmem [#allocation7], %s255
        %p257 = pneg %p138
        %p258 = pneg %p135
        %s259 = sand.u32 %s26, 1
        %s260 = scalar_lea.sflag [#allocation9], %s259
        %s261 = sand.u32 %s125, 1
        %s262 = smul.addr %s261, 8
        %s263 = scalar_lea.vmem [#allocation8], %s262
        %p264 = pneg %p166
        %p265 = pneg %p163
        %s266 = sand.u32 %s26, 1
        %s267 = scalar_lea.sflag [#allocation9], %s266
        %s268 = sand.u32 %s153, 1
        %s269 = smul.addr %s268, 8
        %s270 = scalar_lea.vmem [#allocation10], %s269
        %v271 = vld [vmem:[%s230] sm:$0xff]
        %v272 = vld [vmem:[#allocation5] sm:$0xff]
        %v273 = vld [vmem:[#allocation5 + $0x8] sm:$0xff]
        %v274 = vld [vmem:[#allocation5 + $0x10] sm:$0xff]
        %v275 = vld [vmem:[#allocation5 + $0x18] sm:$0xff]
        %vm276 = vcmask 261120
        %v278 = vsel %vm276, %v271, 0
        %280 = vmatpush.msra.mxu0 0.0
        %281 = vmatpush.msra.mxu0 0.0
        %282 = vmatpush.msra.mxu0 0.0
        %283 = vmatpush.msra.mxu0 0.0
        %284 = vmatpush.msra.mxu0 0.0
        %285 = vmatpush.msra.mxu0 0.0
        %286 = vmatpush.msra.mxu0 0.0
        %287 = vmatpush.msra.mxu0 0.0
        %288 = vmatpush.msra.mxu0 0.0
        %289 = vmatpush.msra.mxu0 0.0
        %290 = vmatpush.msra.mxu0 0.0
        %291 = vmatpush.msra.mxu0 0.0
        %292 = vmatpush.msra.mxu0 %v275
        %293 = vmatpush.msra.mxu0 %v274
        %294 = vmatpush.msra.mxu0 %v273
        %295 = vmatpush.msra.mxu0 %v272
        %296 = vmatmul.f32.gmra.mxu0 %v278
        %v297 = vpop.f32.mrf.mxu0
        %v298 = vadd.f32 0.0, %v297
        %299 = vdwg.mxu0
        %vm300 = vcmask 130048
        %301 = vst.msk [vmem:[%s256] sm:$0xff] %vm300, %v298
        %303 = vrot.lane.b32.xlu0 %v298, 112
        %v304 = vpop.permute.xlu0 %303
        %306 = vst.msk [vmem:[%s263] sm:$0xff] %vm300, %v304
        %307 = vrot.lane.b32.xlu0 %v298, 96
        %v308 = vpop.permute.xlu0 %307
        %310 = vst.msk [vmem:[%s270] sm:$0xff] %vm300, %v308
        %s311 = sand.u32 %s97, 1
        %s312 = scalar_lea.sflag [#allocation4], %s311
        %s313 = sand.u32 %s97, 1
        %s314 = smul.addr %s313, 8
        %s315 = scalar_lea.vmem [#allocation7], %s314
        %s316 = sand.u32 %s26, 1
        %s317 = scalar_lea.sflag [#allocation9], %s316
        %s318 = sand.u32 %s125, 1
        %s319 = smul.addr %s318, 8
        %s320 = scalar_lea.vmem [#allocation8], %s319
        %s321 = sand.u32 %s26, 1
        %s322 = scalar_lea.sflag [#allocation9], %s321
        %s323 = sand.u32 %s153, 1
        %s324 = smul.addr %s323, 8
        %s325 = scalar_lea.vmem [#allocation10], %s324
        // Predicated region
        $region37: #{tpu_custom_call.1} parent=27 // pred_check
          %p326 = pneg %p107
        $region38: #{tpu_custom_call.1} parent=27 // pred_check_branch
          %328 = sbr.rel (%p326) target = $region40
        $region39: #{tpu_custom_call.1} parent=27 // pred_region
          %330 = vsyncadd %s312, 0
          %s331 = sadd.s32 %s31, %s30
          %s332 = smul.addr %s331, 8
          %s333 = scalar_lea.hbm %s2, %s332
          %s335 = sshll.u32 %s315, 4
          %s336 = int_to_ptr.vmem [resolvable:$true] %s335
          %s337 = sshll.u32 %s333, 4
          %s338 = int_to_ptr.hbm [resolvable:$true] %s337
          %340 = dma.vmem_to_hbm [thread:$0]  %s336, 128, %s338, %s312
        $region40: #{tpu_custom_call.1} parent=27 // pred_fallthru
          _
        // Predicated region
        $region41: #{tpu_custom_call.1} parent=27 // pred_check
          %p341 = pneg %p135
        $region42: #{tpu_custom_call.1} parent=27 // pred_check_branch
          %343 = sbr.rel (%p341) target = $region44
        $region43: #{tpu_custom_call.1} parent=27 // pred_region
          %345 = vsyncadd %s317, 0
          %s346 = sadd.s32 %s31, %s30
          %s347 = smul.addr %s346, 8
          %s348 = scalar_lea.hbm %s3, %s347
          %s350 = sshll.u32 %s320, 4
          %s351 = int_to_ptr.vmem [resolvable:$true] %s350
          %s352 = sshll.u32 %s348, 4
          %s353 = int_to_ptr.hbm [resolvable:$true] %s352
          %355 = dma.vmem_to_hbm [thread:$0]  %s351, 128, %s353, %s317
        $region44: #{tpu_custom_call.1} parent=27 // pred_fallthru
          _
        // Predicated region
        $region45: #{tpu_custom_call.1} parent=27 // pred_check
          %p356 = pneg %p163
        $region46: #{tpu_custom_call.1} parent=27 // pred_check_branch
          %358 = sbr.rel (%p356) target = $region48
        $region47: #{tpu_custom_call.1} parent=27 // pred_region
          %360 = vsyncadd %s322, 0
          %s361 = sadd.s32 %s31, %s30
          %s362 = smul.addr %s361, 8
          %s363 = scalar_lea.hbm %s4, %s362
          %s365 = sshll.u32 %s325, 4
          %s366 = int_to_ptr.vmem [resolvable:$true] %s365
          %s367 = sshll.u32 %s363, 4
          %s368 = int_to_ptr.hbm [resolvable:$true] %s367
          %370 = dma.vmem_to_hbm [thread:$0]  %s366, 128, %s368, %s322
        $region48: #{tpu_custom_call.1} parent=27 // pred_fallthru
          _
      $region28: #{tpu_custom_call.1} parent=5 // pred_fallthru
        _
      %p371 = scmp.le.s32.totalorder 2, %s21
      // Predicated region
      $region49: #{tpu_custom_call.1} parent=5 // pred_check
        %p372 = pneg %p371
      $region50: #{tpu_custom_call.1} parent=5 // pred_check_branch
        %374 = sbr.rel (%p372) target = $region52
      $region51: #{tpu_custom_call.1} parent=5 // pred_region
        %s375 = ssub.s32 %s21, 2
        // Predicated region
        $region53: #{tpu_custom_call.1} parent=51 // pred_check
          %p376 = pneg %p113
        $region54: #{tpu_custom_call.1} parent=51 // pred_check_branch
          %378 = sbr.rel (%p376) target = $region56
        $region55: #{tpu_custom_call.1} parent=51 // pred_region
          %s379 = sand.u32 %s98, 1
          %s380 = scalar_lea.sflag [#allocation4], %s379
          %s381 = sand.u32 %s98, 1
          %s382 = smul.addr %s381, 8
          %s383 = scalar_lea.vmem [#allocation7], %s382
          %385 = dma.done %s380, 128
        $region56: #{tpu_custom_call.1} parent=51 // pred_fallthru
          _
        // Predicated region
        $region57: #{tpu_custom_call.1} parent=51 // pred_check
          %p386 = pneg %p141
        $region58: #{tpu_custom_call.1} parent=51 // pred_check_branch
          %388 = sbr.rel (%p386) target = $region60
        $region59: #{tpu_custom_call.1} parent=51 // pred_region
          %s389 = sand.u32 %s27, 1
          %s390 = scalar_lea.sflag [#allocation9], %s389
          %s391 = sand.u32 %s126, 1
          %s392 = smul.addr %s391, 8
          %s393 = scalar_lea.vmem [#allocation8], %s392
          %395 = dma.done %s390, 128
        $region60: #{tpu_custom_call.1} parent=51 // pred_fallthru
          _
        // Predicated region
        $region61: #{tpu_custom_call.1} parent=51 // pred_check
          %p396 = pneg %p169
        $region62: #{tpu_custom_call.1} parent=51 // pred_check_branch
          %398 = sbr.rel (%p396) target = $region64
        $region63: #{tpu_custom_call.1} parent=51 // pred_region
          %s399 = sand.u32 %s27, 1
          %s400 = scalar_lea.sflag [#allocation9], %s399
          %s401 = sand.u32 %s154, 1
          %s402 = smul.addr %s401, 8
          %s403 = scalar_lea.vmem [#allocation10], %s402
          %405 = dma.done %s400, 128
        $region64: #{tpu_custom_call.1} parent=51 // pred_fallthru
          _
      $region52: #{tpu_custom_call.1} parent=5 // pred_fallthru
        _
    $region6: #{tpu_custom_call.1} parent=1 // loop_footer
      %s25 = sadd.s32 1, %s21
    $region7: #{tpu_custom_call.1} parent=1 // loop_footer_branch
      %20 = sbr.rel target = $region3
    $region8: #{tpu_custom_call.1} parent=1 // loop_exit
      _
    %406 = vsyncpa [#allocation3], 1
    %s407 = scalar_lea.sflag [#allocation3], 1
    %408 = vsyncpa %s407, 1
    %409 = vsyncpa [#allocation6], 1
    %410 = vsyncpa [#allocation4], 1
    %s411 = scalar_lea.sflag [#allocation4], 1
    %412 = vsyncpa %s411, 1
    %413 = vsyncpa [#allocation9], 1
    %s414 = scalar_lea.sflag [#allocation9], 1
    %415 = vsyncpa %s414, 1

</llo_original>
